<compile_context>
chip_gen: v7x
topology: tpu7x:2x2x1
jax: 0.10.0
libtpu: 0.0.40
codegen_flags: <defaults>
</compile_context>

<pallas_src>
import jax
import jax.numpy as jnp
from jax.experimental import pallas as pl
from jax.experimental.pallas import tpu as pltpu

BN_EPS = 1e-5
LANE = 128
SUBLANE = 8


def _round_up(v, m):
    return (v + m - 1) // m * m


def _device_budget():
    """(VMEM byte budget used for tile sizing, max tile rows) per TPU generation."""
    try:
        kind = jax.devices()[0].device_kind.lower()
    except Exception:
        kind = ""
    if "v7" in kind:                      # v7x: 64 MiB physical VMEM per TC
        return 40 * 2**20, 512
    return 80 * 2**20, 1024               # v5e / v6e: 128 MiB physical VMEM


def _choose_tile_n(n, c, h2, ncp):
    budget, max_tile = _device_budget()
    # Resident (constant-index-map) blocks: bf16 w1/w2 (x2 for default double buffer)
    # plus small f32 vectors.
    resident = 2 * 2 * (c * h2 + h2 * ncp) + 4 * 4 * (2 * c + h2 + ncp)
    # Per-row streaming: double-buffered h & x tiles (f32) + double-buffered out tile.
    per_row = 2 * 4 * c + 2 * 4 * c + 2 * 4 * ncp
    tile = max(SUBLANE, (budget - resident) // per_row)
    tile = min(max_tile, (tile // SUBLANE) * SUBLANE)
    # Keep >= 2 grid steps so the "parallel" axis feeds both v7x TensorCores.
    if n > SUBLANE:
        tile = min(tile, _round_up(-(-n // 2), SUBLANE))
    return max(SUBLANE, tile)


def _compiler_params(est_vmem_bytes):
    kw = dict(dimension_semantics=("parallel",))
    if est_vmem_bytes > 12 * 2**20:       # above the smallest default scoped limit
        cap, _ = _device_budget()
        kw["vmem_limit_bytes"] = int(min(est_vmem_bytes * 1.3, cap + 16 * 2**20))
    return pltpu.CompilerParams(**kw)


# --------------------------------------------------------------------------- #
# Kernel 1: per-tile partial BN statistics (fully parallel over row tiles)
# --------------------------------------------------------------------------- #
def _bn_partial_kernel(x_ref, psum_ref, psumsq_ref):
    x = x_ref[...].astype(jnp.float32)                    # [TILE_N, C]
    s = jnp.sum(x, axis=0, keepdims=True)                 # [1, C]
    sq = jnp.sum(x * x, axis=0, keepdims=True)            # [1, C]
    # Broadcast across the 8 sublanes of the output block (kept (8,C) so the block
    # satisfies the (8,128) tiling rule); the wrapper reads one copy per tile.
    psum_ref[...] = jnp.broadcast_to(s, psum_ref.shape)
    psumsq_ref[...] = jnp.broadcast_to(sq, psumsq_ref.shape)


# --------------------------------------------------------------------------- #
# Kernel 2: (h + x*scale + shift) @ w1 + b1 -> ReLU -> @ w2_pad + b2_pad
# --------------------------------------------------------------------------- #
def _mlp_kernel(h_ref, x_ref, scale_ref, shift_ref,
                w1_ref, b1_ref, w2_ref, b2_ref, out_ref):
    # Fused BN affine in f32 on the VPU (one mul + two adds per element).
    u = h_ref[...] + x_ref[...] * scale_ref[...] + shift_ref[...]     # [TILE_N, C] f32

    # bf16 MXU matmuls with f32 accumulation.
    z1 = jnp.dot(u.astype(w1_ref.dtype), w1_ref[...],
                 preferred_element_type=jnp.float32)                  # [TILE_N, H2]
    z1 = jnp.maximum(z1 + b1_ref[...], 0.0)                           # f32 ReLU

    z2 = jnp.dot(z1.astype(w2_ref.dtype), w2_ref[...],
                 preferred_element_type=jnp.float32)                  # [TILE_N, NCP]
    out_ref[...] = (z2 + b2_ref[...]).astype(out_ref.dtype)           # lane-dense store


# --------------------------------------------------------------------------- #
# One-time parameter preparation (hoisted out of the forward)
# --------------------------------------------------------------------------- #
def prepare_params(gamma, beta, w1, b1, w2, b2, *, mxu_dtype=jnp.bfloat16):
    nc = w2.shape[1]
    ncp = _round_up(max(nc, LANE), LANE)      # lane-dense output width
    w2_p = jnp.pad(w2, ((0, 0), (0, ncp - nc))).astype(mxu_dtype)
    b2_p = jnp.pad(b2, ((0, 0), (0, ncp - nc))).astype(jnp.float32)
    # TODO(synk): also zero-pad C / H2 to multiples of 128 at init for large models.
    return dict(gamma=gamma.astype(jnp.float32), beta=beta.astype(jnp.float32),
                w1=w1.astype(mxu_dtype), b1=b1.astype(jnp.float32),
                w2=w2_p, b2=b2_p, nc=nc)


# --------------------------------------------------------------------------- #
# Wrapper
# --------------------------------------------------------------------------- #
def mlpnet_forward(x, h, params):
    """x: graph.x [N, C].  h: [N, C].  params: prepare_params(...).  Returns [N, nc]."""
    x = x.astype(jnp.float32)
    h = h.astype(jnp.float32)
    n, c = x.shape
    assert h.shape == (n, c), "h + BN(x) requires matching shapes"

    gamma, beta = params["gamma"], params["beta"]
    w1, b1, w2, b2, nc = params["w1"], params["b1"], params["w2"], params["b2"], params["nc"]
    h2 = w1.shape[1]
    ncp = w2.shape[1]

    tile_n = _choose_tile_n(n, c, h2, ncp)
    n_pad = _round_up(n, tile_n)
    num_tiles = n_pad // tile_n

    if n_pad != n:
        pad_rows = ((0, n_pad - n), (0, 0))
        x_p, h_p = jnp.pad(x, pad_rows), jnp.pad(h, pad_rows)   # zero rows: stats-safe
    else:
        x_p, h_p = x, h

    # ---- Pass 1: parallel per-tile partial sums; tiny combine in plain JAX ----
    est1 = 2 * tile_n * c * 4 + 4 * SUBLANE * c * 4
    psum, psumsq = pl.pallas_call(
        _bn_partial_kernel,
        out_shape=(jax.ShapeDtypeStruct((num_tiles * SUBLANE, c), jnp.float32),
                   jax.ShapeDtypeStruct((num_tiles * SUBLANE, c), jnp.float32)),
        grid=(num_tiles,),
        in_specs=[pl.BlockSpec((tile_n, c), lambda i: (i, 0))],
        out_specs=(pl.BlockSpec((SUBLANE, c), lambda i: (i, 0)),
                   pl.BlockSpec((SUBLANE, c), lambda i: (i, 0))),
        compiler_params=_compiler_params(est1),
        cost_estimate=pl.CostEstimate(
            flops=3 * n_pad * c, transcendentals=0,
            bytes_accessed=4 * (n_pad * c + 2 * num_tiles * SUBLANE * c)),
    )(x_p)

    inv_n = 1.0 / float(n)
    total_sum = psum[::SUBLANE].sum(axis=0, keepdims=True)        # [1, C]
    total_sumsq = psumsq[::SUBLANE].sum(axis=0, keepdims=True)    # [1, C]
    mean = total_sum * inv_n
    # TODO(synk): one-pass E[x^2]-E[x]^2 can cancel badly when mean >> std; switch to a
    # mean-shifted two-pass formulation if inputs are not roughly standardized.
    var = jnp.maximum(total_sumsq * inv_n - mean * mean, 0.0)
    scale = gamma * jax.lax.rsqrt(var + BN_EPS)                   # fused BN affine
    shift = beta - mean * scale

    # ---- Pass 2: row-parallel fused MLP (bf16 MXU, f32 VPU/accumulate) ----
    w_bytes = 2 * (w1.size * w1.dtype.itemsize + w2.size * w2.dtype.itemsize)
    est2 = (4 * tile_n * c * 4 + 2 * tile_n * ncp * 4 + w_bytes
            + 4 * (2 * c + h2 + ncp) * 4)
    out_pad = pl.pallas_call(
        _mlp_kernel,
        out_shape=jax.ShapeDtypeStruct((n_pad, ncp), jnp.float32),
        grid=(num_tiles,),
        in_specs=[
            pl.BlockSpec((tile_n, c), lambda i: (i, 0)),   # h tiles
            pl.BlockSpec((tile_n, c), lambda i: (i, 0)),   # x tiles
            pl.BlockSpec((1, c), lambda i: (0, 0)),        # scale (resident)
            pl.BlockSpec((1, c), lambda i: (0, 0)),        # shift (resident)
            pl.BlockSpec((c, h2), lambda i: (0, 0)),       # w1 bf16 (resident)
            pl.BlockSpec((1, h2), lambda i: (0, 0)),       # b1 (resident)
            pl.BlockSpec((h2, ncp), lambda i: (0, 0)),     # w2 bf16 padded (resident)
            pl.BlockSpec((1, ncp), lambda i: (0, 0)),      # b2 padded (resident)
        ],
        out_specs=pl.BlockSpec((tile_n, ncp), lambda i: (i, 0)),
        compiler_params=_compiler_params(est2),            # "parallel" -> v7x megacore
        cost_estimate=pl.CostEstimate(
            flops=2 * n_pad * (c * h2 + h2 * ncp) + 5 * n_pad * c,
            transcendentals=0,
            bytes_accessed=(4 * (2 * n_pad * c + n_pad * ncp)
                            + 2 * (c * h2 + h2 * ncp))),
    )(h_p, x_p, scale, shift, w1, b1, w2, b2)

    # NOTE: consumers that tolerate the lane-padded [n, 128] slab should use
    # out_pad[:n] directly to avoid this narrow-slice copy on large N.
    return out_pad[:n, :nc]


# --------------------------------------------------------------------------- #
# Params / reference / test
# --------------------------------------------------------------------------- #
def init_params(key, c_in, hidden_size, nc):
    assert c_in == hidden_size, "h + BN(x) requires matching feature dims"
    h2 = hidden_size // 2
    k1, k2, k3, k4, k5, k6 = jax.random.split(key, 6)
    gamma = jnp.ones((1, c_in), jnp.float32) + 0.01 * jax.random.normal(k1, (1, c_in))
    beta = 0.01 * jax.random.normal(k2, (1, c_in), jnp.float32)
    lim1 = 1.0 / jnp.sqrt(hidden_size)
    w1 = jax.random.uniform(k3, (hidden_size, h2), jnp.float32, -lim1, lim1)
    b1 = jax.random.uniform(k4, (1, h2), jnp.float32, -lim1, lim1)
    lim2 = 1.0 / jnp.sqrt(h2)
    w2 = jax.random.uniform(k5, (h2, nc), jnp.float32, -lim2, lim2)
    b2 = jax.random.uniform(k6, (1, nc), jnp.float32, -lim2, lim2)
    return gamma, beta, w1, b1, w2, b2


def _reference(x, h, gamma, beta, w1, b1, w2, b2):
    mean = jnp.mean(x, axis=0, keepdims=True)
    var = jnp.mean((x - mean) ** 2, axis=0, keepdims=True)
    xn = (x - mean) / jnp.sqrt(var + BN_EPS) * gamma + beta
    u = h + xn
    z1 = jnp.maximum(u @ w1 + b1, 0.0)
    return z1 @ w2 + b2


if __name__ == "__main__":
    N, C_IN, HIDDEN, NC = 16, 32, 32, 4
    key = jax.random.PRNGKey(0)
    kx, kh, kp = jax.random.split(key, 3)
    x = jax.random.normal(kx, (N, C_IN), jnp.float32)   # graph.x
    h = jax.random.normal(kh, (N, C_IN), jnp.float32)   # h (hidden_size == c_in)

    raw_params = init_params(kp, C_IN, HIDDEN, NC)
    params = prepare_params(*raw_params)                # one-time pad + bf16 cast

    out = mlpnet_forward(x, h, params)
    out = jax.block_until_ready(out)

    ref = _reference(x, h, *raw_params)                 # f32 reference (PyTorch semantics)
    assert out.shape == (N, NC)
    max_err = float(jnp.max(jnp.abs(out - ref)))
    # bf16-MXU tolerance (accumulation is f32).
    assert jnp.allclose(out, ref, atol=3e-2, rtol=3e-2), f"mismatch vs reference: {max_err}"
    print("KERNEL_OK")
</pallas_src>

<mosaic_0001>
module attributes {stable_mosaic.version = 11 : i64} {
  func.func @_bn_partial_kernel(%arg0: i32, %arg1: memref<8x32xf32, #tpu.memory_space<vmem>>, %arg2: memref<8x32xf32, #tpu.memory_space<vmem>>, %arg3: memref<8x32xf32, #tpu.memory_space<vmem>>) attributes {dimension_semantics = [#tpu.dimension_semantics<parallel>], iteration_bounds = array<i64: 2>, scalar_prefetch = 0 : i64, scratch_operands = 0 : i64, tpu.core_type = #tpu.core_type<tc>, window_params = [{transform_indices = @transform_0, window_bounds = array<i64: 8, 32>}, {transform_indices = @transform_1, window_bounds = array<i64: 8, 32>}, {transform_indices = @transform_2, window_bounds = array<i64: 8, 32>}]} {
    %c0 = arith.constant 0 : index
    %c0_0 = arith.constant 0 : index
    %0 = vector.load %arg1[%c0, %c0_0] : memref<8x32xf32, #tpu.memory_space<vmem>>, vector<8x32xf32>
    %cst = arith.constant dense<0.000000e+00> : vector<32xf32>
    %1 = vector.multi_reduction <add>, %0, %cst [0] : vector<8x32xf32> to vector<32xf32>
    %2 = vector.shape_cast %1 : vector<32xf32> to vector<1x32xf32>
    %3 = arith.mulf %0, %0 : vector<8x32xf32>
    %cst_1 = arith.constant dense<0.000000e+00> : vector<32xf32>
    %4 = vector.multi_reduction <add>, %3, %cst_1 [0] : vector<8x32xf32> to vector<32xf32>
    %5 = vector.shape_cast %4 : vector<32xf32> to vector<1x32xf32>
    %6 = vector.shape_cast %2 : vector<1x32xf32> to vector<1x32xf32>
    %7 = vector.broadcast %6 : vector<1x32xf32> to vector<8x32xf32>
    %c0_2 = arith.constant 0 : index
    %c0_3 = arith.constant 0 : index
    %8 = vector.load %arg2[%c0_2, %c0_3] : memref<8x32xf32, #tpu.memory_space<vmem>>, vector<8x32xf32>
    tpu.vector_store %arg2[%c0_2, %c0_3], %7 {strides = array<i32>} : memref<8x32xf32, #tpu.memory_space<vmem>>, vector<8x32xf32>,
    %9 = vector.shape_cast %5 : vector<1x32xf32> to vector<1x32xf32>
    %10 = vector.broadcast %9 : vector<1x32xf32> to vector<8x32xf32>
    %c0_4 = arith.constant 0 : index
    %c0_5 = arith.constant 0 : index
    %11 = vector.load %arg3[%c0_4, %c0_5] : memref<8x32xf32, #tpu.memory_space<vmem>>, vector<8x32xf32>
    tpu.vector_store %arg3[%c0_4, %c0_5], %10 {strides = array<i32>} : memref<8x32xf32, #tpu.memory_space<vmem>>, vector<8x32xf32>,
    return
  }
  func.func @transform_0(%arg0: i32) -> (i32, i32) {
    %c0_i32 = arith.constant 0 : i32
    %c0_i32_0 = arith.constant 0 : i32
    return %arg0, %c0_i32 : i32, i32
  }
  func.func @transform_1(%arg0: i32) -> (i32, i32) {
    %c0_i32 = arith.constant 0 : i32
    %c0_i32_0 = arith.constant 0 : i32
    return %arg0, %c0_i32 : i32, i32
  }
  func.func @transform_2(%arg0: i32) -> (i32, i32) {
    %c0_i32 = arith.constant 0 : i32
    %c0_i32_0 = arith.constant 0 : i32
    return %arg0, %c0_i32 : i32, i32
  }
}

</mosaic_0001>

<llo_original>
// kernel: tpu_custom_call.1
$region0: #{tpu_custom_call.1}
  #allocation0 [shape = 'u32[]', space=smem, size = 0x4, offset = 0x4, fixed_abs, tag = 'smem constant byte address 0x4 - core index']
  #allocation1 [shape = 'u32[144,128]{1,0:T(1,128)}', space=vmem, size = 0x12000, scoped, tag = 'internal scratch']
  %s0 = inlined_call_operand.hbm [shape: f32[16,32], index: 0, kind: input, shape index: {}]
  %s1 = inlined_call_operand.hbm [shape: f32[16,32], index: 1, kind: output, shape index: {0}]
  %s2 = inlined_call_operand.hbm [shape: f32[16,32], index: 2, kind: output, shape index: {1}]
  %3 = xla_tuple %s1, %s2
  %s4 = sld [smem:[#allocation0]]
  $region49: #{tpu_custom_call.1} parent=0
    _
  %s6 = ssub.s32 1, %s4
  %s7 = scalar_select 0, %s6, %s4
  $region1: #{tpu_custom_call.1} parent=0
    #allocation2 [shape = 'u8[8192]{0}', space=vmem, size = 0x2000, scoped, tag = 'input window, operand 0']
    #allocation3 [shape = 's32[2]{0}', space=sflag, size = 0x8, scoped, tag = 'scoped memory for tpu_custom_call.1']
    #allocation4 [shape = 's32[2]{0}', space=sflag, size = 0x8, scoped, tag = 'scoped memory for tpu_custom_call.1']
    #allocation5 [shape = 'u8[8192]{0}', space=vmem, size = 0x2000, scoped, tag = 'output window, operand 0']
    #allocation6 [shape = 'u8[8192]{0}', space=vmem, size = 0x2000, scoped, tag = 'output window, operand 1']
    #allocation7 [shape = 's32[2]{0}', space=sflag, size = 0x8, scoped, tag = 'scoped memory for tpu_custom_call.1']
    %8 = vsyncpa [#allocation3], 0
    %s9 = scalar_lea.sflag [#allocation3], 1
    %10 = vsyncpa %s9, 0
    %11 = vsyncpa [#allocation4], 0
    %s12 = scalar_lea.sflag [#allocation4], 1
    %13 = vsyncpa %s12, 0
    %14 = vsyncpa [#allocation7], 0
    %s15 = scalar_lea.sflag [#allocation7], 1
    %16 = vsyncpa %s15, 0
    loop: start=0, step=1, limit=4
    $region2: #{tpu_custom_call.1} parent=1 // loop_pre_header
      _
    $region3: #{tpu_custom_call.1} parent=1 // loop_header
      %s18 = sphi 0, %s22
      %p19 = scmp.ge.s32.totalorder %s18, 4
      %s28 = sphi 0, %s30
      %s31 = sphi 0, %s28
      %s32 = sphi 0, %s31
      %s48 = sphi 0, %s32
      %s54 = sphi 0, %s56
      %s57 = sphi 0, %s54
      %s58 = sphi 0, %s57
      %s74 = sphi 0, %s58
      %s80 = sphi 0, %s82
      %s83 = sphi 0, %s80
      %s84 = sphi 0, %s83
      %s100 = sphi 0, %s84
    $region4: #{tpu_custom_call.1} parent=1 // loop_header_branch
      %21 = sbr.rel (%p19) target = $region8
    $region5: #{tpu_custom_call.1} parent=1 // loop_body
      %s23 = ssub.s32 %s18, 1
      %s24 = ssub.s32 %s18, 2
      %s25 = sadd.s32 %s18, 1
      %s26 = ssub.s32 %s18, %s25
      %p27 = scmp.eq.s32.totalorder %s26, 0
      %s29 = sadd.s32 %s28, 1
      %s30 = scalar_select %p27, %s28, %s29
      %p33 = pneg %p27
      %p34 = scmp.eq.s32.totalorder %s18, 1
      %p35 = por %p33, %p34
      %p36 = scmp.ne.s32.totalorder %s28, %s31
      %p37 = scmp.eq.s32.totalorder %s18, 0
      %p38 = por %p36, %p37
      %p39 = scmp.ne.s32.totalorder %s28, %s31
      %p40 = scmp.eq.s32.totalorder %s23, 1
      %p41 = por %p39, %p40
      %p42 = scmp.ne.s32.totalorder %s31, %s32
      %p43 = scmp.eq.s32.totalorder %s23, 0
      %p44 = por %p42, %p43
      %p45 = scmp.ne.s32.totalorder %s31, %s32
      %p46 = scmp.eq.s32.totalorder %s24, 1
      %p47 = por %p45, %p46
      %p49 = scmp.ne.s32.totalorder %s32, %s48
      %p50 = scmp.eq.s32.totalorder %s24, 0
      %p51 = por %p49, %p50
      %s52 = ssub.s32 %s18, %s25
      %p53 = scmp.eq.s32.totalorder %s52, 0
      %s55 = sadd.s32 %s54, 1
      %s56 = scalar_select %p53, %s54, %s55
      %p59 = pneg %p53
      %p60 = scmp.eq.s32.totalorder %s18, 1
      %p61 = por %p59, %p60
      %p62 = scmp.ne.s32.totalorder %s54, %s57
      %p63 = scmp.eq.s32.totalorder %s18, 0
      %p64 = por %p62, %p63
      %p65 = scmp.ne.s32.totalorder %s54, %s57
      %p66 = scmp.eq.s32.totalorder %s23, 1
      %p67 = por %p65, %p66
      %p68 = scmp.ne.s32.totalorder %s57, %s58
      %p69 = scmp.eq.s32.totalorder %s23, 0
      %p70 = por %p68, %p69
      %p71 = scmp.ne.s32.totalorder %s57, %s58
      %p72 = scmp.eq.s32.totalorder %s24, 1
      %p73 = por %p71, %p72
      %p75 = scmp.ne.s32.totalorder %s58, %s74
      %p76 = scmp.eq.s32.totalorder %s24, 0
      %p77 = por %p75, %p76
      %s78 = ssub.s32 %s18, %s25
      %p79 = scmp.eq.s32.totalorder %s78, 0
      %s81 = sadd.s32 %s80, 1
      %s82 = scalar_select %p79, %s80, %s81
      %p85 = pneg %p79
      %p86 = scmp.eq.s32.totalorder %s18, 1
      %p87 = por %p85, %p86
      %p88 = scmp.ne.s32.totalorder %s80, %s83
      %p89 = scmp.eq.s32.totalorder %s18, 0
      %p90 = por %p88, %p89
      %p91 = scmp.ne.s32.totalorder %s80, %s83
      %p92 = scmp.eq.s32.totalorder %s23, 1
      %p93 = por %p91, %p92
      %p94 = scmp.ne.s32.totalorder %s83, %s84
      %p95 = scmp.eq.s32.totalorder %s23, 0
      %p96 = por %p94, %p95
      %p97 = scmp.ne.s32.totalorder %s83, %s84
      %p98 = scmp.eq.s32.totalorder %s24, 1
      %p99 = por %p97, %p98
      %p101 = scmp.ne.s32.totalorder %s84, %s100
      %p102 = scmp.eq.s32.totalorder %s24, 0
      %p103 = por %p101, %p102
      %p104 = scmp.le.s32.totalorder 1, %s18
      %p105 = scmp.lt.s32.totalorder %s18, 3
      %p106 = pnand %p104, %p105
      %p107 = pneg %p106
      // Predicated region
      $region9: #{tpu_custom_call.1} parent=5 // pred_check
        _
      $region10: #{tpu_custom_call.1} parent=5 // pred_check_branch
        %109 = sbr.rel (%p106) target = $region12
      $region11: #{tpu_custom_call.1} parent=5 // pred_region
        %s110 = ssub.s32 %s18, 1
      $region12: #{tpu_custom_call.1} parent=5 // pred_fallthru
        _
      %p111 = scmp.lt.s32.totalorder %s18, 2
      // Predicated region
      $region13: #{tpu_custom_call.1} parent=5 // pred_check
        %p112 = pneg %p111
      $region14: #{tpu_custom_call.1} parent=5 // pred_check_branch
        %114 = sbr.rel (%p112) target = $region16
      $region15: #{tpu_custom_call.1} parent=5 // pred_region
        // Predicated region
        $region17: #{tpu_custom_call.1} parent=15 // pred_check
          %p115 = pneg %p38
        $region18: #{tpu_custom_call.1} parent=15 // pred_check_branch
          %117 = sbr.rel (%p115) target = $region20
        $region19: #{tpu_custom_call.1} parent=15 // pred_region
          %s118 = sand.u32 %s28, 1
          %s119 = scalar_lea.sflag [#allocation3], %s118
          %s120 = sand.u32 %s28, 1
          %s121 = smul.addr %s120, 8
          %s122 = scalar_lea.vmem [#allocation2], %s121
          %s124 = ssub.s32 128, 128
          %125 = vsyncadd %s119, %s124
          %s126 = smul.addr %s18, 128
          %s127 = scalar_lea.hbm %s0, %s126
          %s129 = sshll.u32 %s122, 4
          %s130 = int_to_ptr.vmem [resolvable:$true] %s129
          %132 = dma.hbm_to_vmem [thread:$0]  %s127, 128, %s130, %s119
        $region20: #{tpu_custom_call.1} parent=15 // pred_fallthru
          _
      $region16: #{tpu_custom_call.1} parent=5 // pred_fallthru
        _
      %p133 = scmp.le.s32.totalorder 1, %s18
      %p134 = scmp.lt.s32.totalorder %s18, 3
      %p135 = pnand %p133, %p134
      %p136 = pneg %p135
      // Predicated region
      $region21: #{tpu_custom_call.1} parent=5 // pred_check
        _
      $region22: #{tpu_custom_call.1} parent=5 // pred_check_branch
        %138 = sbr.rel (%p135) target = $region24
      $region23: #{tpu_custom_call.1} parent=5 // pred_region
        %s139 = ssub.s32 %s18, 1
        %s140 = sand.u32 %s31, 1
        %s141 = scalar_lea.sflag [#allocation3], %s140
        %s142 = sand.u32 %s31, 1
        %s143 = smul.addr %s142, 8
        %s144 = scalar_lea.vmem [#allocation2], %s143
        // Predicated region
        $region25: #{tpu_custom_call.1} parent=23 // pred_check
          %p145 = pneg %p44
        $region26: #{tpu_custom_call.1} parent=23 // pred_check_branch
          %147 = sbr.rel (%p145) target = $region28
        $region27: #{tpu_custom_call.1} parent=23 // pred_region
          %148 = dma.done %s141, 128
        $region28: #{tpu_custom_call.1} parent=23 // pred_fallthru
          _
        %s149 = sand.u32 %s31, 1
        %s150 = scalar_lea.sflag [#allocation3], %s149
        %s151 = sand.u32 %s31, 1
        %s152 = smul.addr %s151, 8
        %s153 = scalar_lea.vmem [#allocation2], %s152
        %p154 = pneg %p44
        %p155 = pneg %p41
        %p156 = pneg %p70
        %p157 = pneg %p67
        %s158 = sand.u32 %s57, 1
        %s159 = scalar_lea.sflag [#allocation4], %s158
        %s160 = sand.u32 %s57, 1
        %s161 = smul.addr %s160, 8
        %s162 = scalar_lea.vmem [#allocation5], %s161
        %p163 = pneg %p96
        %p164 = pneg %p93
        %s165 = sand.u32 %s83, 1
        %s166 = scalar_lea.sflag [#allocation7], %s165
        %s167 = sand.u32 %s83, 1
        %s168 = smul.addr %s167, 8
        %s169 = scalar_lea.vmem [#allocation6], %s168
        %v170 = vld [vmem:[%s144] sm:$0xff]
        %vm171 = vcmask 261120
        %v172 = vsel %vm171, %v170, 0.0
        %v173 = vrot.slane %v172, 4
        %v174 = vadd.f32 %v172, %v173
        %v175 = vrot.slane %v174, 2
        %v176 = vadd.f32 %v174, %v175
        %v177 = vrot.slane %v176, 1
        %v178 = vadd.f32 %v176, %v177
        %v179 = vmul.f32 %v170, %v170
        %v180 = vsel %vm171, %v179, 0.0
        %v181 = vrot.slane %v180, 4
        %v182 = vadd.f32 %v180, %v181
        %v183 = vrot.slane %v182, 2
        %v184 = vadd.f32 %v182, %v183
        %v185 = vrot.slane %v184, 1
        %v186 = vadd.f32 %v184, %v185
        %187 = vst.msk [vmem:[%s162] sm:$0xff] %vm171, %v178
        %188 = vst.msk [vmem:[%s169] sm:$0xff] %vm171, %v186
        %s189 = sand.u32 %s57, 1
        %s190 = scalar_lea.sflag [#allocation4], %s189
        %s191 = sand.u32 %s57, 1
        %s192 = smul.addr %s191, 8
        %s193 = scalar_lea.vmem [#allocation5], %s192
        %s194 = sand.u32 %s83, 1
        %s195 = scalar_lea.sflag [#allocation7], %s194
        %s196 = sand.u32 %s83, 1
        %s197 = smul.addr %s196, 8
        %s198 = scalar_lea.vmem [#allocation6], %s197
        // Predicated region
        $region29: #{tpu_custom_call.1} parent=23 // pred_check
          %p199 = pneg %p67
        $region30: #{tpu_custom_call.1} parent=23 // pred_check_branch
          %201 = sbr.rel (%p199) target = $region32
        $region31: #{tpu_custom_call.1} parent=23 // pred_region
          %s203 = ssub.s32 128, 128
          %204 = vsyncadd %s190, %s203
          %s205 = smul.addr %s23, 128
          %s206 = scalar_lea.hbm %s1, %s205
          %s208 = sshll.u32 %s193, 4
          %s209 = int_to_ptr.vmem [resolvable:$true] %s208
          %211 = dma.vmem_to_hbm [thread:$0]  %s209, 128, %s206, %s190
        $region32: #{tpu_custom_call.1} parent=23 // pred_fallthru
          _
        // Predicated region
        $region33: #{tpu_custom_call.1} parent=23 // pred_check
          %p212 = pneg %p93
        $region34: #{tpu_custom_call.1} parent=23 // pred_check_branch
          %214 = sbr.rel (%p212) target = $region36
        $region35: #{tpu_custom_call.1} parent=23 // pred_region
          %s216 = ssub.s32 128, 128
          %217 = vsyncadd %s195, %s216
          %s218 = smul.addr %s23, 128
          %s219 = scalar_lea.hbm %s2, %s218
          %s221 = sshll.u32 %s198, 4
          %s222 = int_to_ptr.vmem [resolvable:$true] %s221
          %224 = dma.vmem_to_hbm [thread:$0]  %s222, 128, %s219, %s195
        $region36: #{tpu_custom_call.1} parent=23 // pred_fallthru
          _
      $region24: #{tpu_custom_call.1} parent=5 // pred_fallthru
        _
      %p225 = scmp.le.s32.totalorder 2, %s18
      // Predicated region
      $region37: #{tpu_custom_call.1} parent=5 // pred_check
        %p226 = pneg %p225
      $region38: #{tpu_custom_call.1} parent=5 // pred_check_branch
        %228 = sbr.rel (%p226) target = $region40
      $region39: #{tpu_custom_call.1} parent=5 // pred_region
        %s229 = ssub.s32 %s18, 2
        // Predicated region
        $region41: #{tpu_custom_call.1} parent=39 // pred_check
          %p230 = pneg %p73
        $region42: #{tpu_custom_call.1} parent=39 // pred_check_branch
          %232 = sbr.rel (%p230) target = $region44
        $region43: #{tpu_custom_call.1} parent=39 // pred_region
          %s233 = sand.u32 %s58, 1
          %s234 = scalar_lea.sflag [#allocation4], %s233
          %s235 = sand.u32 %s58, 1
          %s236 = smul.addr %s235, 8
          %s237 = scalar_lea.vmem [#allocation5], %s236
          %238 = dma.done %s234, 128
        $region44: #{tpu_custom_call.1} parent=39 // pred_fallthru
          _
        // Predicated region
        $region45: #{tpu_custom_call.1} parent=39 // pred_check
          %p239 = pneg %p99
        $region46: #{tpu_custom_call.1} parent=39 // pred_check_branch
          %241 = sbr.rel (%p239) target = $region48
        $region47: #{tpu_custom_call.1} parent=39 // pred_region
          %s242 = sand.u32 %s84, 1
          %s243 = scalar_lea.sflag [#allocation7], %s242
          %s244 = sand.u32 %s84, 1
          %s245 = smul.addr %s244, 8
          %s246 = scalar_lea.vmem [#allocation6], %s245
          %247 = dma.done %s243, 128
        $region48: #{tpu_custom_call.1} parent=39 // pred_fallthru
          _
      $region40: #{tpu_custom_call.1} parent=5 // pred_fallthru
        _
    $region6: #{tpu_custom_call.1} parent=1 // loop_footer
      %s22 = sadd.s32 1, %s18
    $region7: #{tpu_custom_call.1} parent=1 // loop_footer_branch
      %17 = sbr.rel target = $region3
    $region8: #{tpu_custom_call.1} parent=1 // loop_exit
      _
    %248 = vsyncpa [#allocation3], 1
    %s249 = scalar_lea.sflag [#allocation3], 1
    %250 = vsyncpa %s249, 1
    %251 = vsyncpa [#allocation4], 1
    %s252 = scalar_lea.sflag [#allocation4], 1
    %253 = vsyncpa %s252, 1
    %254 = vsyncpa [#allocation7], 1
    %s255 = scalar_lea.sflag [#allocation7], 1
    %256 = vsyncpa %s255, 1

</llo_original>
